<compile_context>
chip_gen: v7x
topology: tpu7x:2x2x1
jax: 0.10.0
libtpu: 0.0.40
codegen_flags: <defaults>
</compile_context>

<pallas_src>
import functools

import jax
import jax.numpy as jnp
from jax.experimental import pallas as pl
from jax.experimental.pallas import tpu as pltpu

LANE = 128


def _round_up(x, m):
    return ((x + m - 1) // m) * m


def _tile_budget():
    """Per-generation tile cap + scoped VMEM limit.

    v5e/v6e have 128 MiB physical VMEM -> TB up to 128K lanes with a 64 MiB limit.
    v7x only has 64 MiB physical -> cap TB at 64K lanes, 40 MiB limit (also the safe
    fallback when the device kind is unknown).
    """
    tb_max, vmem_limit = 65536, 40 * 1024 * 1024
    try:
        kind = jax.devices()[0].device_kind.lower()
        if ("v5" in kind) or ("v6" in kind):
            tb_max, vmem_limit = 131072, 64 * 1024 * 1024
    except Exception:
        pass
    return tb_max, vmem_limit


def netb_kernel(xt_ref, p_ref, b2_ref, o_ref):
    xt = xt_ref[...]                                   # [5, TB]   (batch on lanes)
    p = p_ref[...]                                     # [25, 7]   packed w1|b1|w2
    w1 = p[:, 0:5]                                     # [25, 5]
    b1 = p[:, 5:6]                                     # [25, 1]
    w2 = p[:, 6:7]                                     # [25, 1]
    b2 = b2_ref[0]                                     # scalar (SMEM)

    # fc1 + ReLU : MXU matmul, f32 accumulation, bias broadcast over lanes.
    h = jnp.dot(w1, xt, preferred_element_type=jnp.float32)       # [25, TB]
    h = jnp.maximum(h + b1, 0.0)

    # fc2 : per-lane FMAs + cross-sublane reduce (VPU/XLU), overlaps under the MXU
    # slot; output stays lane-dense.  (MXU fc2 would serialize behind fc1.)
    y = jnp.sum(h * w2, axis=0, keepdims=True) + b2               # [1, TB]
    o_ref[...] = y.astype(o_ref.dtype)


@functools.partial(jax.jit, static_argnames=())
def netb_forward(x, w1, b1, w2, b2):
    """x: [B, 5] (PyTorch layout). Returns y: [B, 1]."""
    B = x.shape[0]
    if B == 0:                                         # guard: avoid 0-division below
        return jnp.zeros((0, 1), jnp.float32)

    tb_max, vmem_limit = _tile_budget()

    # Even-split batch padding: pad only to a 128-lane multiple, then distribute the
    # batch over equal lane-aligned tiles (waste < 128 rows, uniform pipeline).
    b_lane = _round_up(B, LANE)
    num_tiles = pl.cdiv(b_lane, tb_max)
    tb = _round_up(pl.cdiv(b_lane, num_tiles), LANE)   # tb <= tb_max, multiple of 128
    b_pad = num_tiles * tb
    grid = (num_tiles,)

    # Feature-major input: [5, B_pad].  allow_input_fusion (below) lets XLA fold this
    # pad+transpose into the pallas_call input DMA instead of re-writing x to HBM.
    xf = x.astype(jnp.float32)
    if b_pad != B:
        xf = jnp.pad(xf, ((0, b_pad - B), (0, 0)))
    xt = xf.T                                                     # [5, b_pad]

    # Pack the tiny params into one VMEM tile; b2 goes to SMEM as a scalar.
    params = jnp.concatenate(
        [
            w1.astype(jnp.float32).reshape(25, 5),
            b1.astype(jnp.float32).reshape(25, 1),
            w2.astype(jnp.float32).reshape(25, 1),                # w2 is [1, 25]
        ],
        axis=1,
    )                                                             # [25, 7]
    b2s = b2.astype(jnp.float32).reshape(1)                       # [1] -> SMEM

    cost = pl.CostEstimate(
        flops=2 * b_pad * (5 * 25 + 25),
        transcendentals=0,
        bytes_accessed=(5 * b_pad + b_pad + 25 * 7 + 1) * 4,
    )

    out = pl.pallas_call(
        netb_kernel,
        out_shape=jax.ShapeDtypeStruct((1, b_pad), jnp.float32),
        grid=grid,
        in_specs=[
            pl.BlockSpec((5, tb), lambda i: (0, i)),          # x tile, pipelined
            pl.BlockSpec((25, 7), lambda i: (0, 0)),          # packed w1|b1|w2 (resident)
            pl.BlockSpec(memory_space=pltpu.MemorySpace.SMEM),  # b2 scalar
        ],
        out_specs=pl.BlockSpec((1, tb), lambda i: (0, i)),    # lane-dense output slab
        compiler_params=pltpu.CompilerParams(
            dimension_semantics=("parallel",),                # v7x: shard over 2 TCs
            vmem_limit_bytes=vmem_limit,
            allow_input_fusion=[True, False, False],          # fuse x pad+transpose
        ),
        cost_estimate=cost,
    )(xt, params, b2s)

    return out[:, :B].reshape(B, 1)


def init_params(key):
    # Mimic nn.Linear's U(-1/sqrt(fan_in), 1/sqrt(fan_in)), PyTorch weight layout.
    k1, k2, k3, k4 = jax.random.split(key, 4)
    lim1 = 1.0 / jnp.sqrt(5.0)
    lim2 = 1.0 / jnp.sqrt(25.0)
    w1 = jax.random.uniform(k1, (25, 5), jnp.float32, -lim1, lim1)
    b1 = jax.random.uniform(k2, (25,), jnp.float32, -lim1, lim1)
    w2 = jax.random.uniform(k3, (1, 25), jnp.float32, -lim2, lim2)
    b2 = jax.random.uniform(k4, (1,), jnp.float32, -lim2, lim2)
    return w1, b1, w2, b2


if __name__ == "__main__":
    key = jax.random.PRNGKey(0)
    kx, kp = jax.random.split(key)

    B = 8
    x = jax.random.normal(kx, (B, 5), jnp.float32)
    w1, b1, w2, b2 = init_params(kp)

    out = netb_forward(x, w1, b1, w2, b2)
    out = jax.block_until_ready(out)

    # Reference check in plain JAX (PyTorch semantics: y = relu(x W1^T + b1) W2^T + b2).
    ref = jnp.maximum(x @ w1.T + b1, 0.0) @ w2.T + b2
    assert out.shape == (B, 1)
    assert jnp.allclose(out, ref, atol=1e-5, rtol=1e-5)

    print("KERNEL_OK")
</pallas_src>

<mosaic_0001>
module attributes {stable_mosaic.version = 11 : i64} {
  func.func @netb_kernel(%arg0: i32, %arg1: memref<5x128xf32, #tpu.memory_space<vmem>>, %arg2: memref<25x7xf32, #tpu.memory_space<vmem>>, %arg3: memref<1xf32, #tpu.memory_space<smem>>, %arg4: memref<1x128xf32, #tpu.memory_space<vmem>>) attributes {dimension_semantics = [#tpu.dimension_semantics<parallel>], iteration_bounds = array<i64: 1>, scalar_prefetch = 0 : i64, scratch_operands = 0 : i64, tpu.core_type = #tpu.core_type<tc>, window_params = [{transform_indices = @transform_0, window_bounds = array<i64: 5, 128>}, {pipeline_mode = #tpu.pipeline_mode<synchronous>, transform_indices = @transform_1, window_bounds = array<i64: 25, 7>}, {transform_indices = @transform_2, window_bounds = array<i64: 1>}, {transform_indices = @transform_3, window_bounds = array<i64: 1, 128>}]} {
    %c0 = arith.constant 0 : index
    %c0_0 = arith.constant 0 : index
    %0 = vector.load %arg1[%c0, %c0_0] : memref<5x128xf32, #tpu.memory_space<vmem>>, vector<5x128xf32>
    %c0_1 = arith.constant 0 : index
    %c0_2 = arith.constant 0 : index
    %1 = vector.load %arg2[%c0_1, %c0_2] : memref<25x7xf32, #tpu.memory_space<vmem>>, vector<25x7xf32>
    %2 = vector.extract_strided_slice %1 {offsets = [0, 0], sizes = [25, 5], strides = [1, 1]} : vector<25x7xf32> to vector<25x5xf32>
    %3 = vector.extract_strided_slice %1 {offsets = [0, 5], sizes = [25, 1], strides = [1, 1]} : vector<25x7xf32> to vector<25x1xf32>
    %4 = vector.extract_strided_slice %1 {offsets = [0, 6], sizes = [25, 1], strides = [1, 1]} : vector<25x7xf32> to vector<25x1xf32>
    %c0_3 = arith.constant 0 : index
    %5 = memref.load %arg3[%c0_3] : memref<1xf32, #tpu.memory_space<smem>>
    %cst = arith.constant dense<0.000000e+00> : vector<25x128xf32>
    %6 = tpu.matmul %2, %0, %cst {dimension_numbers = #tpu.dot_dimension_numbers<[1], [0], [0], [1], [0, 0, 1, 1], [], []>} : vector<25x5xf32>, vector<5x128xf32>, vector<25x128xf32> -> vector<25x128xf32>
    %7 = vector.broadcast %3 : vector<25x1xf32> to vector<25x128xf32>
    %8 = arith.addf %6, %7 : vector<25x128xf32>
    %cst_4 = arith.constant 0.000000e+00 : f32
    %9 = vector.broadcast %cst_4 : f32 to vector<25x128xf32>
    %10 = arith.maximumf %8, %9 : vector<25x128xf32>
    %11 = vector.broadcast %4 : vector<25x1xf32> to vector<25x128xf32>
    %12 = arith.mulf %10, %11 : vector<25x128xf32>
    %cst_5 = arith.constant dense<0.000000e+00> : vector<128xf32>
    %13 = vector.multi_reduction <add>, %12, %cst_5 [0] : vector<25x128xf32> to vector<128xf32>
    %14 = vector.shape_cast %13 : vector<128xf32> to vector<1x128xf32>
    %15 = vector.broadcast %5 : f32 to vector<1x128xf32>
    %16 = arith.addf %14, %15 : vector<1x128xf32>
    %c0_6 = arith.constant 0 : index
    %c0_7 = arith.constant 0 : index
    %17 = vector.load %arg4[%c0_6, %c0_7] : memref<1x128xf32, #tpu.memory_space<vmem>>, vector<1x128xf32>
    tpu.vector_store %arg4[%c0_6, %c0_7], %16 {strides = array<i32>} : memref<1x128xf32, #tpu.memory_space<vmem>>, vector<1x128xf32>,
    return
  }
  func.func @transform_0(%arg0: i32) -> (i32, i32) {
    %c0_i32 = arith.constant 0 : i32
    %c0_i32_0 = arith.constant 0 : i32
    return %c0_i32, %arg0 : i32, i32
  }
  func.func @transform_1(%arg0: i32) -> (i32, i32) {
    %c0_i32 = arith.constant 0 : i32
    %c0_i32_0 = arith.constant 0 : i32
    %c0_i32_1 = arith.constant 0 : i32
    return %c0_i32, %c0_i32_0 : i32, i32
  }
  func.func @transform_2(%arg0: i32) -> i32 {
    %c0_i32 = arith.constant 0 : i32
    %c0_i32_0 = arith.constant 0 : i32
    return %c0_i32 : i32
  }
  func.func @transform_3(%arg0: i32) -> (i32, i32) {
    %c0_i32 = arith.constant 0 : i32
    %c0_i32_0 = arith.constant 0 : i32
    return %c0_i32, %arg0 : i32, i32
  }
}

</mosaic_0001>

<llo_original>
// kernel: netb_forward.2
$region0: #{netb_forward.2}
  #allocation0 [shape = 'u32[]', space=smem, size = 0x4, offset = 0x4, fixed_abs, tag = 'smem constant byte address 0x4 - core index']
  #allocation1 [shape = 'u32[144,128]{1,0:T(1,128)}', space=vmem, size = 0x12000, scoped, tag = 'internal scratch']
  #allocation2 [shape = 'u32[2048]{0}', space=vmem, size = 0x2000, scoped, tag = 'scoped memory for netb_forward.2']
  #allocation3 [shape = 'u32[2048]{0}', space=vmem, size = 0x2000, scoped, tag = 'scoped memory for netb_forward.2']
  #allocation4 [shape = 'u32[2048]{0}', space=vmem, size = 0x2000, scoped, tag = 'scoped memory for netb_forward.2']
  #allocation5 [shape = 'u32[2048]{0}', space=vmem, size = 0x2000, scoped, tag = 'scoped memory for netb_forward.2']
  #allocation6 [shape = 'u32[2048]{0}', space=vmem, size = 0x2000, scoped, tag = 'scoped memory for netb_forward.2']
  #allocation7 [shape = 'f32[1]{0:T(128)S(6)}', space=smem, size = 0x200, scoped, tag = 'scoped memory for netb_forward.2']
  %s0 = inlined_call_operand.vmem [shape: f32[25,7], index: 0, kind: input, shape index: {}]
  %s1 = inlined_call_operand.<no memory space> [shape: f32[1], index: 1, kind: input, shape index: {}]
  %s2 = inlined_call_operand.vmem [shape: f32[8,5], index: 2, kind: input, shape index: {}]
  %s3 = inlined_call_operand.<no memory space> [shape: f32[], index: 3, kind: input, shape index: {}]
  %s4 = inlined_call_operand.vmem [shape: f32[1,128], index: 4, kind: output, shape index: {}]
  %s5 = sld [smem:[#allocation0]]
  $region22: #{netb_forward.2} parent=0
    _
  %s7 = ssub.s32 1, %s5
  %s8 = scalar_select 0, %s7, %s5
  %v9 = vstv %s3
  %10 = sst [smem:[#allocation7]] %s1
  $region1: #{netb_forward.2} parent=0
    #allocation8 [shape = 'u8[4096]{0}', space=vmem, size = 0x1000, dematerialized = true, scoped, tag = 'FusionAdapter Buffer %fusion.1 = f32[5,128]{1,0:T(8,128)} fusion(%param_2.5, %param_3.3), kind=kLoop, calls=%fused_computation.2.clone, metadata={op_name="jit(netb_forward)/transpose" stack_frame_id=8}']
    // Predicated region
    $region2: #{netb_forward.2} parent=1 // pred_check
      _
    $region3: #{netb_forward.2} parent=1 // pred_check_branch
      %12 = sbr.rel (0) target = $region5
    $region4: #{netb_forward.2} parent=1 // pred_region
      _
    $region5: #{netb_forward.2} parent=1 // pred_fallthru
      _
    // Predicated region
    $region6: #{netb_forward.2} parent=1 // pred_check
      _
    $region7: #{netb_forward.2} parent=1 // pred_check_branch
      %14 = sbr.rel (0) target = $region9
    $region8: #{netb_forward.2} parent=1 // pred_region
      _
    $region9: #{netb_forward.2} parent=1 // pred_fallthru
      _
    // Predicated region
    $region10: #{netb_forward.2} parent=1 // pred_check
      _
    $region11: #{netb_forward.2} parent=1 // pred_check_branch
      %16 = sbr.rel (0) target = $region13
    $region12: #{netb_forward.2} parent=1 // pred_region
      _
    $region13: #{netb_forward.2} parent=1 // pred_fallthru
      _
    %v17 = vld [vmem:[%s2] sm:$0x1f]
    %v18 = vlaneseq
    %v19 = vshrl.u32 %v18, 7
    %vm21 = vcmp.lt.s32.totalorder %v19, 5
    %v22 = vsel %vm21, %v17, %v9
    %v23 = vlaneseq
    %v24 = vand.u32 %v23, 127
    %vm26 = vcmp.lt.s32.totalorder %v24, 8
    %v27 = vsel %vm26, %v22, %v9
    %29 = vst [vmem:[#allocation8] sm:$0xff] %v27
    %v30 = vld [vmem:[#allocation8] sm:$0x1f]
    %v31 = vld [vmem:[%s0] sm:$0xff]
    %v32 = vld [vmem:[%s0 + $0x8] sm:$0xff]
    %v33 = vld [vmem:[%s0 + $0x10] sm:$0xff]
    %v34 = vld [vmem:[%s0 + $0x18] sm:$0x1]
    %s35 = sld [smem:[#allocation7]]
    %37 = vset.pattern.permute.xlu0 5
    %38 = vperm.xlu0 %37, %v31
    %v39 = vpop.permute.xlu0 %38
    %42 = vset.pattern.permute.xlu0 5
    %43 = vperm.xlu0 %42, %v32
    %v44 = vpop.permute.xlu0 %43
    %47 = vset.pattern.permute.xlu0 5
    %48 = vperm.xlu0 %47, %v33
    %v49 = vpop.permute.xlu0 %48
    %52 = vset.pattern.permute.xlu0 5
    %53 = vperm.xlu0 %52, %v34
    %v54 = vpop.permute.xlu0 %53
    %vm56 = vcmask 39936
    %v57 = vsel %vm56, %v31, 0
    %v59 = vsel %vm56, %v32, 0
    %v61 = vsel %vm56, %v33, 0
    %v63 = vsel %vm56, %v34, 0
    %vm65 = vcmask 1044480
    %v67 = vsel %vm65, %v30, 0
    %69 = vmatprep.subr.mxu0 0.0
    %70 = vmatpush1.msra.mxu0 %v67
    %71 = vmatprep.subr.mxu0 0.0
    %72 = vmatpush1.msra.mxu0 0.0
    %73 = vmatprep.subr.mxu0 0.0
    %74 = vmatpush1.msra.mxu0 0.0
    %75 = vmatprep.subr.mxu0 0.0
    %76 = vmatpush1.msra.mxu0 0.0
    %77 = vmatprep.subr.mxu0 0.0
    %78 = vmatpush1.msra.mxu0 0.0
    %79 = vmatprep.subr.mxu0 0.0
    %80 = vmatpush1.msra.mxu0 0.0
    %81 = vmatprep.subr.mxu0 0.0
    %82 = vmatpush1.msra.mxu0 0.0
    %83 = vmatprep.subr.mxu0 0.0
    %84 = vmatpush1.msra.mxu0 0.0
    %85 = vmatprep.subr.mxu0 0.0
    %86 = vmatpush1.msra.mxu0 0.0
    %87 = vmatprep.subr.mxu0 0.0
    %88 = vmatpush1.msra.mxu0 0.0
    %89 = vmatprep.subr.mxu0 0.0
    %90 = vmatpush1.msra.mxu0 0.0
    %91 = vmatprep.subr.mxu0 0.0
    %92 = vmatpush1.msra.mxu0 0.0
    %93 = vmatprep.subr.mxu0 0.0
    %94 = vmatpush1.msra.mxu0 0.0
    %95 = vmatprep.subr.mxu0 0.0
    %96 = vmatpush1.msra.mxu0 0.0
    %97 = vmatprep.subr.mxu0 0.0
    %98 = vmatpush1.msra.mxu0 0.0
    %99 = vmatprep.subr.mxu0 0.0
    %100 = vmatpush1.msra.mxu0 0.0
    %101 = vmatprep.subr.mxu0 0.0
    %102 = vmatpush1.msra.mxu0 0.0
    %103 = vmatprep.subr.mxu0 0.0
    %104 = vmatpush1.msra.mxu0 0.0
    %105 = vmatprep.subr.mxu0 0.0
    %106 = vmatpush1.msra.mxu0 0.0
    %107 = vmatprep.subr.mxu0 0.0
    %108 = vmatpush1.msra.mxu0 0.0
    %109 = vmatprep.subr.mxu0 0.0
    %110 = vmatpush1.msra.mxu0 0.0
    %111 = vmatprep.subr.mxu0 0.0
    %112 = vmatpush1.msra.mxu0 0.0
    %113 = vmatprep.subr.mxu0 0.0
    %114 = vmatpush1.msra.mxu0 0.0
    %115 = vmatprep.subr.mxu0 0.0
    %116 = vmatpush1.msra.mxu0 0.0
    %117 = vmatprep.subr.mxu0 0.0
    %118 = vmatpush1.msra.mxu0 0.0
    %119 = vmatprep.subr.mxu0 0.0
    %120 = vmatpush1.msra.mxu0 0.0
    %121 = vmatprep.subr.mxu0 0.0
    %122 = vmatpush1.msra.mxu0 0.0
    %123 = vmatprep.subr.mxu0 0.0
    %124 = vmatpush1.msra.mxu0 0.0
    %125 = vmatprep.subr.mxu0 0.0
    %126 = vmatpush1.msra.mxu0 0.0
    %127 = vmatprep.subr.mxu0 0.0
    %128 = vmatpush1.msra.mxu0 0.0
    %129 = vmatprep.subr.mxu0 0.0
    %130 = vmatpush1.msra.mxu0 0.0
    %131 = vmatprep.subr.mxu0 0.0
    %132 = vmatpush1.msra.mxu0 0.0
    %133 = vmatprep.mubr.f32.mxu0 0.0
    %134 = vmatmul.mubr.f32.gmra.mrb[0].mxu0 %v57
    %v135 = vpop.f32.mrb[0].mxu0
    %v136 = vadd.f32 %v39, %v135
    %v137 = vpop.f32.mrb[0].mxu0
    %138 = vmatprep.mubr.f32.mxu0 0.0
    %139 = vmatmul.mubr.f32.gmra.mrb[0].mxu0 %v59
    %v140 = vpop.f32.mrb[0].mxu0
    %v141 = vadd.f32 %v44, %v140
    %v142 = vpop.f32.mrb[0].mxu0
    %143 = vmatprep.mubr.f32.mxu0 0.0
    %144 = vmatmul.mubr.f32.gmra.mrb[0].mxu0 %v61
    %v145 = vpop.f32.mrb[0].mxu0
    %v146 = vadd.f32 %v49, %v145
    %v147 = vpop.f32.mrb[0].mxu0
    %148 = vmatprep.mubr.f32.mxu0 0.0
    %149 = vmatmul.mubr.f32.gmra.mrb[0].mxu0 %v63
    %v150 = vpop.f32.mrb[0].mxu0
    %v151 = vadd.f32 %v54, %v150
    %v152 = vpop.f32.mrb[0].mxu0
    %153 = vdwg.mxu0
    %v154 = vmax.f32 %v136, 0.0
    %v155 = vmax.f32 %v141, 0.0
    %v156 = vmax.f32 %v146, 0.0
    %v157 = vmax.f32 %v151, 0.0
    %158 = vset.pattern.permute.xlu0 6
    %159 = vperm.xlu0 %158, %v31
    %v160 = vpop.permute.xlu0 %159
    %162 = vset.pattern.permute.xlu0 6
    %163 = vperm.xlu0 %162, %v32
    %v164 = vpop.permute.xlu0 %163
    %166 = vset.pattern.permute.xlu0 6
    %167 = vperm.xlu0 %166, %v33
    %v168 = vpop.permute.xlu0 %167
    %170 = vset.pattern.permute.xlu0 6
    %171 = vperm.xlu0 %170, %v34
    %v172 = vpop.permute.xlu0 %171
    %v174 = vmul.f32 %v154, %v160
    %v175 = vmul.f32 %v155, %v164
    %v176 = vmul.f32 %v156, %v168
    %v177 = vmul.f32 %v157, %v172
    %v178 = vadd.f32 %v174, %v175
    %v179 = vadd.f32 %v178, %v176
    %vm180 = vcmask 1040384
    %v181 = vsel %vm180, %v177, 0.0
    %v182 = vadd.f32 %v179, %v181
    %v183 = vrot.slane %v182, 4
    %v184 = vadd.f32 %v182, %v183
    %v185 = vrot.slane %v184, 2
    %v186 = vadd.f32 %v184, %v185
    %v187 = vrot.slane %v186, 1
    %v188 = vadd.f32 %v186, %v187
    %v189 = vstv %s35
    %v190 = vadd.f32 %v188, %v189
    %191 = vst [vmem:[%s4] sm:$0x1] %v190
    // Predicated region
    $region14: #{netb_forward.2} parent=1 // pred_check
      _
    $region15: #{netb_forward.2} parent=1 // pred_check_branch
      %193 = sbr.rel (0) target = $region17
    $region16: #{netb_forward.2} parent=1 // pred_region
      _
    $region17: #{netb_forward.2} parent=1 // pred_fallthru
      _
    // Predicated region
    $region18: #{netb_forward.2} parent=1 // pred_check
      _
    $region19: #{netb_forward.2} parent=1 // pred_check_branch
      %195 = sbr.rel (0) target = $region21
    $region20: #{netb_forward.2} parent=1 // pred_region
      _
    $region21: #{netb_forward.2} parent=1 // pred_fallthru
      _

</llo_original>
